<compile_context>
chip_gen: v7x
topology: tpu7x:2x2x1
jax: 0.10.0
libtpu: 0.0.40
codegen_flags: <defaults>
</compile_context>

<pallas_src>
import jax
import jax.numpy as jnp
from jax.experimental import pallas as pl
from jax.experimental.pallas import tpu as pltpu


# ----------------------------------------------------------------------------
# Forward pass: the placeholder layer does no work -> no kernel launch at all.
# ----------------------------------------------------------------------------
def empty_layer_forward(x: jax.Array) -> jax.Array:
    """EmptyLayer forward: placeholder, pure identity. No kernel is launched."""
    return x


# ----------------------------------------------------------------------------
# Optional materialized identity copy as a Pallas kernel (lane-dense, tiled).
# ----------------------------------------------------------------------------
def _copy_kernel(x_ref, o_ref):
    o_ref[...] = x_ref[...]


_MIN_PALLAS_BYTES = 1 << 20          # below this, plain XLA copy is faster
_DEFAULT_BLOCK_BYTES = 4 << 20       # v5e / v6e: 4 buffers = 16 MiB
_V7X_BLOCK_BYTES = 8 << 20           # v7x (faster HBM): 4 buffers = 32 MiB


def _target_block_bytes() -> int:
    """Pick block size per generation; v7x (<=64 MiB VMEM, ~3.2 TB/s) wants bigger."""
    try:
        info = pltpu.get_tpu_info()
        vmem = getattr(info, "vmem_capacity_bytes", None)
        if vmem is not None and vmem <= 96 * 1024 * 1024:
            return _V7X_BLOCK_BYTES
    except Exception:
        pass
    return _DEFAULT_BLOCK_BYTES


def _choose_cols(n: int) -> int | None:
    """Largest lane-dense column count (multiple of 128) that divides n exactly."""
    for c in (512, 256, 128):
        if n % c == 0:
            return c
    return None


def empty_layer_copy(x: jax.Array, *, min_pallas_bytes: int = _MIN_PALLAS_BYTES) -> jax.Array:
    """Materialized identity copy (only if a physical copy is genuinely needed)."""
    orig_shape = x.shape
    dtype = x.dtype
    itemsize = jnp.dtype(dtype).itemsize

    n = x.size
    if n == 0:
        return jnp.copy(x)

    cols = _choose_cols(n)
    # Tiny tensors or non-128-divisible sizes: single XLA copy pass, no pad/slice.
    if cols is None or n * itemsize < min_pallas_bytes:
        return jnp.copy(x)

    rows = n // cols
    row_bytes = cols * itemsize

    target_bytes = _target_block_bytes()
    row_tile = max(1, target_bytes // row_bytes)

    # Large arrays: guarantee >= 2 grid steps so both v7x TensorCores get work.
    if rows * row_bytes >= 2 * target_bytes:
        row_tile = min(row_tile, pl.cdiv(rows, 2))

    if row_tile >= rows:
        row_tile = rows                              # single full-extent block (legal)
    else:
        row_tile = max(32, (row_tile // 32) * 32)    # dense sublanes for all dtypes

    grid = (pl.cdiv(rows, row_tile),)                # ragged tail handled by Pallas masking

    # Explicit VMEM limit: 2 in + 2 out double-buffers plus slack. Safe on every
    # generation (v5e/v6e physical 128 MiB; v7x physical 64 MiB).
    vmem_limit = min(4 * row_tile * row_bytes + (8 << 20), 48 << 20)

    x2 = x.reshape(rows, cols)

    out2 = pl.pallas_call(
        _copy_kernel,
        out_shape=jax.ShapeDtypeStruct((rows, cols), dtype),
        grid_spec=pltpu.PrefetchScalarGridSpec(
            num_scalar_prefetch=0,
            grid=grid,
            in_specs=[pl.BlockSpec((row_tile, cols), lambda i: (i, 0))],
            out_specs=pl.BlockSpec((row_tile, cols), lambda i: (i, 0)),
        ),
        compiler_params=pltpu.CompilerParams(
            dimension_semantics=("parallel",),
            vmem_limit_bytes=vmem_limit,
        ),
        cost_estimate=pl.CostEstimate(
            flops=0, transcendentals=0, bytes_accessed=2 * n * itemsize),
    )(x2)

    return out2.reshape(orig_shape)


if __name__ == "__main__":
    key = jax.random.PRNGKey(0)
    # Small NCHW shape consistent with a YOLO feature map.
    x = jax.random.normal(key, (2, 4, 16, 16), dtype=jnp.float32)

    # Forward pass: zero-cost identity (the module's actual semantics).
    y_fast = empty_layer_forward(x)
    jax.block_until_ready(y_fast)
    assert y_fast.shape == x.shape and y_fast.dtype == x.dtype
    assert bool(jnp.all(y_fast == x))

    # Public copy path: 8 KiB input short-circuits to a plain XLA copy.
    y_copy = empty_layer_copy(x)
    jax.block_until_ready(y_copy)
    assert y_copy.shape == x.shape and y_copy.dtype == x.dtype
    assert bool(jnp.all(y_copy == x))

    # Exercise the Pallas kernel path once (force it even for the small input).
    y_pallas = empty_layer_copy(x, min_pallas_bytes=0)
    jax.block_until_ready(y_pallas)
    assert y_pallas.shape == x.shape and y_pallas.dtype == x.dtype
    assert bool(jnp.all(y_pallas == x))

    print("KERNEL_OK")
</pallas_src>

<mosaic_0001>
module attributes {stable_mosaic.version = 11 : i64} {
  func.func @_copy_kernel(%arg0: i32, %arg1: memref<4x512xf32, #tpu.memory_space<vmem>>, %arg2: memref<4x512xf32, #tpu.memory_space<vmem>>) attributes {dimension_semantics = [#tpu.dimension_semantics<parallel>], iteration_bounds = array<i64: 1>, scalar_prefetch = 0 : i64, scratch_operands = 0 : i64, tpu.core_type = #tpu.core_type<tc>, window_params = [{transform_indices = @transform_0, window_bounds = array<i64: 4, 512>}, {transform_indices = @transform_1, window_bounds = array<i64: 4, 512>}]} {
    %c0 = arith.constant 0 : index
    %c0_0 = arith.constant 0 : index
    %0 = vector.load %arg1[%c0, %c0_0] : memref<4x512xf32, #tpu.memory_space<vmem>>, vector<4x512xf32>
    %c0_1 = arith.constant 0 : index
    %c0_2 = arith.constant 0 : index
    %1 = vector.load %arg2[%c0_1, %c0_2] : memref<4x512xf32, #tpu.memory_space<vmem>>, vector<4x512xf32>
    tpu.vector_store %arg2[%c0_1, %c0_2], %0 {strides = array<i32>} : memref<4x512xf32, #tpu.memory_space<vmem>>, vector<4x512xf32>,
    return
  }
  func.func @transform_0(%arg0: i32) -> (i32, i32) {
    %c0_i32 = arith.constant 0 : i32
    %c0_i32_0 = arith.constant 0 : i32
    return %arg0, %c0_i32 : i32, i32
  }
  func.func @transform_1(%arg0: i32) -> (i32, i32) {
    %c0_i32 = arith.constant 0 : i32
    %c0_i32_0 = arith.constant 0 : i32
    return %arg0, %c0_i32 : i32, i32
  }
}

</mosaic_0001>

<llo_original>
// kernel: tpu_custom_call.1
$region0: #{tpu_custom_call.1}
  #allocation0 [shape = 'u32[]', space=smem, size = 0x4, offset = 0x4, fixed_abs, tag = 'smem constant byte address 0x4 - core index']
  #allocation1 [shape = 'u32[144,128]{1,0:T(1,128)}', space=vmem, size = 0x12000, scoped, tag = 'internal scratch']
  %s0 = inlined_call_operand.hbm [shape: f32[4,512], index: 0, kind: input, shape index: {}]
  %s1 = inlined_call_operand.hbm [shape: f32[4,512], index: 1, kind: output, shape index: {}]
  %s2 = sld [smem:[#allocation0]]
  $region18: #{tpu_custom_call.1} parent=0
    _
  %s4 = ssub.s32 1, %s2
  %s5 = scalar_select 0, %s4, %s2
  $region1: #{tpu_custom_call.1} parent=0
    #allocation2 [shape = 'u8[8192]{0}', space=vmem, size = 0x2000, scoped, tag = 'input window, operand 0, single buffered']
    #allocation3 [shape = 's32[1]{0}', space=sflag, size = 0x4, scoped, tag = 'scoped memory for tpu_custom_call.1']
    #allocation4 [shape = 's32[1]{0}', space=sflag, size = 0x4, scoped, tag = 'scoped memory for tpu_custom_call.1']
    #allocation5 [shape = 'u8[8192]{0}', space=vmem, size = 0x2000, scoped, tag = 'output window, operand 0, single buffered']
    %6 = vsyncpa [#allocation3], 0
    %7 = vsyncpa [#allocation4], 0
    // Predicated region
    $region2: #{tpu_custom_call.1} parent=1 // pred_check
      _
    $region3: #{tpu_custom_call.1} parent=1 // pred_check_branch
      %9 = sbr.rel (0) target = $region5
    $region4: #{tpu_custom_call.1} parent=1 // pred_region
      %s11 = ssub.s32 256, 256
      %12 = vsyncadd [#allocation3], %s11
      %s14 = sshll.u32 [#allocation2], 4
      %s15 = int_to_ptr.vmem [resolvable:$true] %s14
      %17 = dma.hbm_to_vmem [thread:$0]  %s0, 256, %s15, [#allocation3]
    $region5: #{tpu_custom_call.1} parent=1 // pred_fallthru
      _
    // Predicated region
    $region6: #{tpu_custom_call.1} parent=1 // pred_check
      _
    $region7: #{tpu_custom_call.1} parent=1 // pred_check_branch
      %19 = sbr.rel (0) target = $region9
    $region8: #{tpu_custom_call.1} parent=1 // pred_region
      %20 = dma.done [#allocation3], 256
    $region9: #{tpu_custom_call.1} parent=1 // pred_fallthru
      _
    %v21 = vld [vmem:[#allocation2] sm:$0xff]
    %v22 = vld [vmem:[#allocation2 + $0x8] sm:$0xff]
    %23 = vst [vmem:[#allocation5] sm:$0xff] %v21
    %24 = vst [vmem:[#allocation5 + $0x8] sm:$0xff] %v22
    // Predicated region
    $region10: #{tpu_custom_call.1} parent=1 // pred_check
      _
    $region11: #{tpu_custom_call.1} parent=1 // pred_check_branch
      %26 = sbr.rel (0) target = $region13
    $region12: #{tpu_custom_call.1} parent=1 // pred_region
      %s28 = ssub.s32 256, 256
      %29 = vsyncadd [#allocation4], %s28
      %s31 = sshll.u32 [#allocation5], 4
      %s32 = int_to_ptr.vmem [resolvable:$true] %s31
      %34 = dma.vmem_to_hbm [thread:$0]  %s32, 256, %s1, [#allocation4]
    $region13: #{tpu_custom_call.1} parent=1 // pred_fallthru
      _
    // Predicated region
    $region14: #{tpu_custom_call.1} parent=1 // pred_check
      _
    $region15: #{tpu_custom_call.1} parent=1 // pred_check_branch
      %36 = sbr.rel (0) target = $region17
    $region16: #{tpu_custom_call.1} parent=1 // pred_region
      %37 = dma.done [#allocation4], 256
    $region17: #{tpu_custom_call.1} parent=1 // pred_fallthru
      _
    %38 = vsyncpa [#allocation3], 1
    %39 = vsyncpa [#allocation4], 1

</llo_original>
